<compile_context>
chip_gen: v7x
topology: tpu7x:2x2x1
jax: 0.10.0
libtpu: 0.0.40
codegen_flags: <defaults>
</compile_context>

<pallas_src>
import jax
import jax.numpy as jnp
from jax.experimental import pallas as pl
from jax.experimental.pallas import tpu as pltpu


def _outconv_kernel(x_ref, w_ref, b_ref, o_ref):
    # x_ref: (nb, Cin, TM)  w_ref: (Cout, Cin)  b_ref: (Cout, 1)  o_ref: (nb, Cout, TM)
    w = w_ref[...]
    b = b_ref[...]
    # nb is a small, statically-capped block dim -> unrolled plain 2D matmuls
    # (keeps everything as simple MXU dots; f32 accumulation as in PyTorch).
    for i in range(x_ref.shape[0]):
        acc = jnp.dot(w, x_ref[i], preferred_element_type=jnp.float32)
        o_ref[i] = (acc + b).astype(o_ref.dtype)


def _ceil_div(a, b):
    return -(-a // b)


def _round_up(v, m):
    return _ceil_div(v, m) * m


def _pick_tiles(N, Cin, Cout, M, itemsize):
    """Choose (nb, tm) by bytes/step, respecting VMEM and megacore needs."""
    TARGET_BYTES = 2 << 20        # ~2 MiB of x traffic per grid step
    VMEM_BUDGET = 40 << 20        # keep buffered tiles well inside v7x's 64 MiB
    MAX_TM = 8192
    MAX_NB = 16                   # unroll bound for the in-kernel batch loop

    # Lane-dense M tile: big enough (in bytes) to amortize per-step overhead.
    tm_cap = _round_up(_ceil_div(TARGET_BYTES, max(1, Cin * itemsize)), 128)
    tm_cap = max(1024, min(MAX_TM, tm_cap))
    tm = M if M <= tm_cap else tm_cap      # full extent, or a multiple of 128

    # Small feature maps: block the batch axis too so steps stay DMA-dense.
    nb = 1
    if tm == M:
        step_bytes = Cin * tm * itemsize
        if step_bytes < TARGET_BYTES and N > 1:
            nb = min(N, MAX_NB, _ceil_div(TARGET_BYTES, step_bytes))

    # Cap tiles so (3x-buffered x) + (2x-buffered out) + params fit VMEM.
    def vmem_bytes(nb_, tm_):
        return (3 * nb_ * Cin * tm_ + 2 * nb_ * Cout * tm_
                + Cout * Cin + Cout) * itemsize

    while vmem_bytes(nb, tm) > VMEM_BUDGET:
        if nb > 1:
            nb = max(1, nb // 2)
        elif tm > 128:
            tm = max(128, _round_up(tm // 2, 128))
        else:
            break

    # Prefer >= 8 grid steps (keeps both v7x TensorCores fed and preserves
    # pipelining) as long as each step still moves >= half the byte target.
    def steps(nb_, tm_):
        return _ceil_div(N, nb_) * _ceil_div(M, tm_)

    while (steps(nb, tm) < 8 and nb > 1
           and (nb // 2) * Cin * tm * itemsize >= TARGET_BYTES // 2):
        nb //= 2

    return nb, tm, vmem_bytes(nb, tm)


@jax.jit
def out_conv(x_nchw, weight, bias):
    """1x1 Conv2d forward (PyTorch nn.Conv2d(in_channels, out_channels, 1)).

    x_nchw: (N, Cin, H, W)
    weight: (Cout, Cin, 1, 1)   -- PyTorch Conv2d weight layout
    bias:   (Cout,)
    returns (N, Cout, H, W)
    """
    N, Cin, H, W = x_nchw.shape
    Cout = weight.shape[0]
    M = H * W
    itemsize = jnp.dtype(x_nchw.dtype).itemsize

    # (C, M) layout: contiguous reshapes only, no transposes on either side.
    x_cm = x_nchw.reshape(N, Cin, M)
    w_mat = weight.reshape(Cout, Cin)
    b_col = bias.reshape(Cout, 1)

    nb, tm, vmem_needed = _pick_tiles(N, Cin, Cout, M, itemsize)
    grid = (_ceil_div(N, nb), _ceil_div(M, tm))
    total_steps = grid[0] * grid[1]

    # Triple-buffer x only when there are enough steps for it to matter
    # (hides strided-DMA issue latency when Cin is small).
    x_spec_kwargs = {}
    if total_steps >= 4:
        x_spec_kwargs["pipeline_mode"] = pl.Buffered(3)

    cost = pl.CostEstimate(
        flops=2 * N * M * Cin * Cout,
        transcendentals=0,
        bytes_accessed=(N * Cin * M + Cout * Cin + Cout + N * Cout * M) * itemsize,
    )

    out = pl.pallas_call(
        _outconv_kernel,
        out_shape=jax.ShapeDtypeStruct((N, Cout, M), x_nchw.dtype),
        grid_spec=pl.GridSpec(
            grid=grid,
            in_specs=[
                # x tile: (nb, Cin, tm) per (batch-block, m-tile).
                pl.BlockSpec((nb, Cin, tm), lambda n, m: (n, 0, m),
                             **x_spec_kwargs),
                # Weight / bias: constant index_map -> VMEM-resident, no re-DMA.
                pl.BlockSpec((Cout, Cin), lambda n, m: (0, 0)),
                pl.BlockSpec((Cout, 1), lambda n, m: (0, 0)),
            ],
            out_specs=pl.BlockSpec((nb, Cout, tm), lambda n, m: (n, 0, m)),
        ),
        compiler_params=pltpu.CompilerParams(
            # Both grid axes are independent -> shard across TensorCores (v7x).
            dimension_semantics=("parallel", "parallel"),
            # Derived from the actual buffered tile footprint (not hard-coded).
            vmem_limit_bytes=int(max(32 << 20, vmem_needed + (4 << 20))),
        ),
        cost_estimate=cost,
    )(x_cm, w_mat, b_col)

    return out.reshape(N, Cout, H, W)


if __name__ == "__main__":
    key = jax.random.PRNGKey(0)
    kx, kw, kb = jax.random.split(key, 3)

    N, Cin, Cout, H, W = 2, 4, 3, 16, 16

    x = jax.random.normal(kx, (N, Cin, H, W), dtype=jnp.float32)
    # Deterministic synthetic parameters (shapes match nn.Conv2d(Cin, Cout, 1)).
    weight = jax.random.normal(kw, (Cout, Cin, 1, 1), dtype=jnp.float32) * 0.1
    bias = jax.random.normal(kb, (Cout,), dtype=jnp.float32) * 0.1

    y = jax.block_until_ready(out_conv(x, weight, bias))

    # Reference check in plain JAX (same math as PyTorch 1x1 conv).
    y_ref = (
        jnp.einsum("nchw,oc->nohw", x, weight.reshape(Cout, Cin))
        + bias[None, :, None, None]
    )
    assert y.shape == (N, Cout, H, W)
    assert jnp.allclose(y, y_ref, atol=1e-5), "mismatch vs reference"

    print("KERNEL_OK")
</pallas_src>

<mosaic_0001>
module attributes {stable_mosaic.version = 11 : i64} {
  func.func @_outconv_kernel(%arg0: i32, %arg1: i32, %arg2: memref<2x4x256xf32, #tpu.memory_space<vmem>>, %arg3: memref<3x4xf32, #tpu.memory_space<vmem>>, %arg4: memref<3x1xf32, #tpu.memory_space<vmem>>, %arg5: memref<2x3x256xf32, #tpu.memory_space<vmem>>) attributes {dimension_semantics = [#tpu.dimension_semantics<parallel>, #tpu.dimension_semantics<parallel>], iteration_bounds = array<i64: 1, 1>, scalar_prefetch = 0 : i64, scratch_operands = 0 : i64, tpu.core_type = #tpu.core_type<tc>, window_params = [{transform_indices = @transform_0, window_bounds = array<i64: 2, 4, 256>}, {pipeline_mode = #tpu.pipeline_mode<synchronous>, transform_indices = @transform_1, window_bounds = array<i64: 3, 4>}, {pipeline_mode = #tpu.pipeline_mode<synchronous>, transform_indices = @transform_2, window_bounds = array<i64: 3, 1>}, {transform_indices = @transform_3, window_bounds = array<i64: 2, 3, 256>}]} {
    %c0 = arith.constant 0 : index
    %c0_0 = arith.constant 0 : index
    %0 = vector.load %arg3[%c0, %c0_0] : memref<3x4xf32, #tpu.memory_space<vmem>>, vector<3x4xf32>
    %c0_1 = arith.constant 0 : index
    %c0_2 = arith.constant 0 : index
    %1 = vector.load %arg4[%c0_1, %c0_2] : memref<3x1xf32, #tpu.memory_space<vmem>>, vector<3x1xf32>
    %c0_3 = arith.constant 0 : index
    %c0_4 = arith.constant 0 : index
    %c0_5 = arith.constant 0 : index
    %2 = vector.load %arg2[%c0_3, %c0_4, %c0_5] : memref<2x4x256xf32, #tpu.memory_space<vmem>>, vector<1x4x256xf32>
    %3 = vector.shape_cast %2 : vector<1x4x256xf32> to vector<4x256xf32>
    %cst = arith.constant dense<0.000000e+00> : vector<3x256xf32>
    %4 = tpu.matmul %0, %3, %cst {dimension_numbers = #tpu.dot_dimension_numbers<[1], [0], [0], [1], [0, 0, 1, 1], [], []>} : vector<3x4xf32>, vector<4x256xf32>, vector<3x256xf32> -> vector<3x256xf32>
    %5 = vector.broadcast %1 : vector<3x1xf32> to vector<3x256xf32>
    %6 = arith.addf %4, %5 : vector<3x256xf32>
    %c0_6 = arith.constant 0 : index
    %c0_7 = arith.constant 0 : index
    %c0_8 = arith.constant 0 : index
    %7 = vector.load %arg5[%c0_6, %c0_7, %c0_8] : memref<2x3x256xf32, #tpu.memory_space<vmem>>, vector<1x3x256xf32>
    %8 = vector.shape_cast %7 : vector<1x3x256xf32> to vector<3x256xf32>
    %9 = vector.shape_cast %6 : vector<3x256xf32> to vector<1x3x256xf32>
    tpu.vector_store %arg5[%c0_6, %c0_7, %c0_8], %9 {strides = array<i32>} : memref<2x3x256xf32, #tpu.memory_space<vmem>>, vector<1x3x256xf32>,
    %c1 = arith.constant 1 : index
    %c0_9 = arith.constant 0 : index
    %c0_10 = arith.constant 0 : index
    %10 = vector.load %arg2[%c1, %c0_9, %c0_10] : memref<2x4x256xf32, #tpu.memory_space<vmem>>, vector<1x4x256xf32>
    %11 = vector.shape_cast %10 : vector<1x4x256xf32> to vector<4x256xf32>
    %cst_11 = arith.constant dense<0.000000e+00> : vector<3x256xf32>
    %12 = tpu.matmul %0, %11, %cst_11 {dimension_numbers = #tpu.dot_dimension_numbers<[1], [0], [0], [1], [0, 0, 1, 1], [], []>} : vector<3x4xf32>, vector<4x256xf32>, vector<3x256xf32> -> vector<3x256xf32>
    %13 = vector.broadcast %1 : vector<3x1xf32> to vector<3x256xf32>
    %14 = arith.addf %12, %13 : vector<3x256xf32>
    %c1_12 = arith.constant 1 : index
    %c0_13 = arith.constant 0 : index
    %c0_14 = arith.constant 0 : index
    %15 = vector.load %arg5[%c1_12, %c0_13, %c0_14] : memref<2x3x256xf32, #tpu.memory_space<vmem>>, vector<1x3x256xf32>
    %16 = vector.shape_cast %15 : vector<1x3x256xf32> to vector<3x256xf32>
    %17 = vector.shape_cast %14 : vector<3x256xf32> to vector<1x3x256xf32>
    tpu.vector_store %arg5[%c1_12, %c0_13, %c0_14], %17 {strides = array<i32>} : memref<2x3x256xf32, #tpu.memory_space<vmem>>, vector<1x3x256xf32>,
    return
  }
  func.func @transform_0(%arg0: i32, %arg1: i32) -> (i32, i32, i32) {
    %c0_i32 = arith.constant 0 : i32
    %c0_i32_0 = arith.constant 0 : i32
    return %arg0, %c0_i32, %arg1 : i32, i32, i32
  }
  func.func @transform_1(%arg0: i32, %arg1: i32) -> (i32, i32) {
    %c0_i32 = arith.constant 0 : i32
    %c0_i32_0 = arith.constant 0 : i32
    %c0_i32_1 = arith.constant 0 : i32
    return %c0_i32, %c0_i32_0 : i32, i32
  }
  func.func @transform_2(%arg0: i32, %arg1: i32) -> (i32, i32) {
    %c0_i32 = arith.constant 0 : i32
    %c0_i32_0 = arith.constant 0 : i32
    %c0_i32_1 = arith.constant 0 : i32
    return %c0_i32, %c0_i32_0 : i32, i32
  }
  func.func @transform_3(%arg0: i32, %arg1: i32) -> (i32, i32, i32) {
    %c0_i32 = arith.constant 0 : i32
    %c0_i32_0 = arith.constant 0 : i32
    return %arg0, %c0_i32, %arg1 : i32, i32, i32
  }
}

</mosaic_0001>

<llo_original>
// kernel: out_conv.1
$region0: #{out_conv.1}
  #allocation0 [shape = 'u32[]', space=smem, size = 0x4, offset = 0x4, fixed_abs, tag = 'smem constant byte address 0x4 - core index']
  #allocation1 [shape = 'u32[144,128]{1,0:T(1,128)}', space=vmem, size = 0x12000, scoped, tag = 'internal scratch']
  %s0 = inlined_call_operand.vmem [shape: f32[2,4,256], index: 0, kind: input, shape index: {}]
  %s1 = inlined_call_operand.vmem [shape: f32[3,4], index: 1, kind: input, shape index: {}]
  %s2 = inlined_call_operand.vmem [shape: f32[3,1], index: 2, kind: input, shape index: {}]
  %s3 = inlined_call_operand.vmem [shape: f32[2,3,256], index: 3, kind: output, shape index: {}]
  %s4 = sld [smem:[#allocation0]]
  $region22: #{out_conv.1} parent=0
    _
  %s6 = ssub.s32 1, %s4
  %s7 = scalar_select 0, %s6, %s4
  // Predicated region
  $region2: #{out_conv.1} parent=0 // pred_check
    _
  $region3: #{out_conv.1} parent=0 // pred_check_branch
    %9 = sbr.rel (0) target = $region5
  $region4: #{out_conv.1} parent=0 // pred_region
    _
  $region5: #{out_conv.1} parent=0 // pred_fallthru
    _
  // Predicated region
  $region6: #{out_conv.1} parent=0 // pred_check
    _
  $region7: #{out_conv.1} parent=0 // pred_check_branch
    %11 = sbr.rel (0) target = $region9
  $region8: #{out_conv.1} parent=0 // pred_region
    _
  $region9: #{out_conv.1} parent=0 // pred_fallthru
    _
  // Predicated region
  $region10: #{out_conv.1} parent=0 // pred_check
    _
  $region11: #{out_conv.1} parent=0 // pred_check_branch
    %13 = sbr.rel (0) target = $region13
  $region12: #{out_conv.1} parent=0 // pred_region
    _
  $region13: #{out_conv.1} parent=0 // pred_fallthru
    _
  %v14 = vld [vmem:[%s1] sm:$0x7]
  %v15 = vld [vmem:[%s2] sm:$0x7]
  %v16 = vld [vmem:[%s0] sm:$0xff]
  %18 = vset.pattern.permute.xlu0 0
  %19 = vperm.xlu0 %18, %v15
  %v20 = vpop.permute.xlu0 %19
  %v23 = vcombine.high %v16, %v16
  %vm24 = vcmask 31744
  %v26 = vsel %vm24, %v14, 0
  %vm28 = vcmask 1043456
  %v29 = vsel %vm28, %v16, 0
  %v31 = vsel %vm28, %v23, 0
  %33 = vmatprep.subr.mxu0 %v31
  %34 = vmatpush1.msra.mxu0 %v29
  %35 = vmatprep.subr.mxu0 0.0
  %36 = vmatpush1.msra.mxu0 0.0
  %37 = vmatprep.subr.mxu0 0.0
  %38 = vmatpush1.msra.mxu0 0.0
  %39 = vmatprep.subr.mxu0 0.0
  %40 = vmatpush1.msra.mxu0 0.0
  %41 = vmatprep.subr.mxu0 0.0
  %42 = vmatpush1.msra.mxu0 0.0
  %43 = vmatprep.subr.mxu0 0.0
  %44 = vmatpush1.msra.mxu0 0.0
  %45 = vmatprep.subr.mxu0 0.0
  %46 = vmatpush1.msra.mxu0 0.0
  %47 = vmatprep.subr.mxu0 0.0
  %48 = vmatpush1.msra.mxu0 0.0
  %49 = vmatprep.subr.mxu0 0.0
  %50 = vmatpush1.msra.mxu0 0.0
  %51 = vmatprep.subr.mxu0 0.0
  %52 = vmatpush1.msra.mxu0 0.0
  %53 = vmatprep.subr.mxu0 0.0
  %54 = vmatpush1.msra.mxu0 0.0
  %55 = vmatprep.subr.mxu0 0.0
  %56 = vmatpush1.msra.mxu0 0.0
  %57 = vmatprep.subr.mxu0 0.0
  %58 = vmatpush1.msra.mxu0 0.0
  %59 = vmatprep.subr.mxu0 0.0
  %60 = vmatpush1.msra.mxu0 0.0
  %61 = vmatprep.subr.mxu0 0.0
  %62 = vmatpush1.msra.mxu0 0.0
  %63 = vmatprep.subr.mxu0 0.0
  %64 = vmatpush1.msra.mxu0 0.0
  %65 = vmatprep.subr.mxu0 0.0
  %66 = vmatpush1.msra.mxu0 0.0
  %67 = vmatprep.subr.mxu0 0.0
  %68 = vmatpush1.msra.mxu0 0.0
  %69 = vmatprep.subr.mxu0 0.0
  %70 = vmatpush1.msra.mxu0 0.0
  %71 = vmatprep.subr.mxu0 0.0
  %72 = vmatpush1.msra.mxu0 0.0
  %73 = vmatprep.subr.mxu0 0.0
  %74 = vmatpush1.msra.mxu0 0.0
  %75 = vmatprep.subr.mxu0 0.0
  %76 = vmatpush1.msra.mxu0 0.0
  %77 = vmatprep.subr.mxu0 0.0
  %78 = vmatpush1.msra.mxu0 0.0
  %79 = vmatprep.subr.mxu0 0.0
  %80 = vmatpush1.msra.mxu0 0.0
  %81 = vmatprep.subr.mxu0 0.0
  %82 = vmatpush1.msra.mxu0 0.0
  %83 = vmatprep.subr.mxu0 0.0
  %84 = vmatpush1.msra.mxu0 0.0
  %85 = vmatprep.subr.mxu0 0.0
  %86 = vmatpush1.msra.mxu0 0.0
  %87 = vmatprep.subr.mxu0 0.0
  %88 = vmatpush1.msra.mxu0 0.0
  %89 = vmatprep.subr.mxu0 0.0
  %90 = vmatpush1.msra.mxu0 0.0
  %91 = vmatprep.subr.mxu0 0.0
  %92 = vmatpush1.msra.mxu0 0.0
  %93 = vmatprep.subr.mxu0 0.0
  %94 = vmatpush1.msra.mxu0 0.0
  %95 = vmatprep.subr.mxu0 0.0
  %96 = vmatpush1.msra.mxu0 0.0
  %97 = vmatprep.mubr.f32.mxu0 0.0
  %98 = vmatmul.mubr.f32.gmra.mrb[0].mxu0 %v26
  %v99 = vpop.f32.mrb[0].mxu0
  %v100 = vadd.f32 %v20, %v99
  %v101 = vpop.f32.mrb[0].mxu0
  %v102 = vadd.f32 %v20, %v101
  %103 = vdwg.mxu0
  %v106 = vcombine.low %v100, %v102
  %108 = vst [vmem:[%s3] sm:$0x77] %v106
  %s109 = scalar_lea.vmem %s0, 8
  %v110 = vld [vmem:[%s109] sm:$0xff]
  %v112 = vcombine.high %v110, %v110
  %v113 = vsel %vm28, %v110, 0
  %v115 = vsel %vm28, %v112, 0
  %117 = vmatprep.subr.mxu0 %v115
  %118 = vmatpush1.msra.mxu0 %v113
  %119 = vmatprep.subr.mxu0 0.0
  %120 = vmatpush1.msra.mxu0 0.0
  %121 = vmatprep.subr.mxu0 0.0
  %122 = vmatpush1.msra.mxu0 0.0
  %123 = vmatprep.subr.mxu0 0.0
  %124 = vmatpush1.msra.mxu0 0.0
  %125 = vmatprep.subr.mxu0 0.0
  %126 = vmatpush1.msra.mxu0 0.0
  %127 = vmatprep.subr.mxu0 0.0
  %128 = vmatpush1.msra.mxu0 0.0
  %129 = vmatprep.subr.mxu0 0.0
  %130 = vmatpush1.msra.mxu0 0.0
  %131 = vmatprep.subr.mxu0 0.0
  %132 = vmatpush1.msra.mxu0 0.0
  %133 = vmatprep.subr.mxu0 0.0
  %134 = vmatpush1.msra.mxu0 0.0
  %135 = vmatprep.subr.mxu0 0.0
  %136 = vmatpush1.msra.mxu0 0.0
  %137 = vmatprep.subr.mxu0 0.0
  %138 = vmatpush1.msra.mxu0 0.0
  %139 = vmatprep.subr.mxu0 0.0
  %140 = vmatpush1.msra.mxu0 0.0
  %141 = vmatprep.subr.mxu0 0.0
  %142 = vmatpush1.msra.mxu0 0.0
  %143 = vmatprep.subr.mxu0 0.0
  %144 = vmatpush1.msra.mxu0 0.0
  %145 = vmatprep.subr.mxu0 0.0
  %146 = vmatpush1.msra.mxu0 0.0
  %147 = vmatprep.subr.mxu0 0.0
  %148 = vmatpush1.msra.mxu0 0.0
  %149 = vmatprep.subr.mxu0 0.0
  %150 = vmatpush1.msra.mxu0 0.0
  %151 = vmatprep.subr.mxu0 0.0
  %152 = vmatpush1.msra.mxu0 0.0
  %153 = vmatprep.subr.mxu0 0.0
  %154 = vmatpush1.msra.mxu0 0.0
  %155 = vmatprep.subr.mxu0 0.0
  %156 = vmatpush1.msra.mxu0 0.0
  %157 = vmatprep.subr.mxu0 0.0
  %158 = vmatpush1.msra.mxu0 0.0
  %159 = vmatprep.subr.mxu0 0.0
  %160 = vmatpush1.msra.mxu0 0.0
  %161 = vmatprep.subr.mxu0 0.0
  %162 = vmatpush1.msra.mxu0 0.0
  %163 = vmatprep.subr.mxu0 0.0
  %164 = vmatpush1.msra.mxu0 0.0
  %165 = vmatprep.subr.mxu0 0.0
  %166 = vmatpush1.msra.mxu0 0.0
  %167 = vmatprep.subr.mxu0 0.0
  %168 = vmatpush1.msra.mxu0 0.0
  %169 = vmatprep.subr.mxu0 0.0
  %170 = vmatpush1.msra.mxu0 0.0
  %171 = vmatprep.subr.mxu0 0.0
  %172 = vmatpush1.msra.mxu0 0.0
  %173 = vmatprep.subr.mxu0 0.0
  %174 = vmatpush1.msra.mxu0 0.0
  %175 = vmatprep.subr.mxu0 0.0
  %176 = vmatpush1.msra.mxu0 0.0
  %177 = vmatprep.subr.mxu0 0.0
  %178 = vmatpush1.msra.mxu0 0.0
  %179 = vmatprep.subr.mxu0 0.0
  %180 = vmatpush1.msra.mxu0 0.0
  %181 = vmatprep.mubr.f32.mxu0 0.0
  %182 = vmatmul.mubr.f32.gmra.mrb[0].mxu0 %v26
  %v183 = vpop.f32.mrb[0].mxu0
  %v184 = vadd.f32 %v20, %v183
  %v185 = vpop.f32.mrb[0].mxu0
  %v186 = vadd.f32 %v20, %v185
  %187 = vdwg.mxu0
  %v190 = vcombine.low %v184, %v186
  %s192 = scalar_lea.vmem %s3, 8
  %193 = vst [vmem:[%s192] sm:$0x77] %v190
  // Predicated region
  $region14: #{out_conv.1} parent=0 // pred_check
    _
  $region15: #{out_conv.1} parent=0 // pred_check_branch
    %195 = sbr.rel (0) target = $region17
  $region16: #{out_conv.1} parent=0 // pred_region
    _
  $region17: #{out_conv.1} parent=0 // pred_fallthru
    _
  // Predicated region
  $region18: #{out_conv.1} parent=0 // pred_check
    _
  $region19: #{out_conv.1} parent=0 // pred_check_branch
    %197 = sbr.rel (0) target = $region21
  $region20: #{out_conv.1} parent=0 // pred_region
    _
  $region21: #{out_conv.1} parent=0 // pred_fallthru
    _

</llo_original>
